<compile_context>
chip_gen: v7x
topology: tpu7x:2x2x1
jax: 0.10.0
libtpu: 0.0.40
codegen_flags: <defaults>
</compile_context>

<pallas_src>
import jax
import jax.numpy as jnp
from jax.experimental import pallas as pl
from jax.experimental.pallas import tpu as pltpu

# ---------------- configuration (small, consistent with the module) -----------
BATCH = 8
OBS_SIZE = 16
ACT_SIZE = 4
HIDDEN = 32
N_HIDDEN_LAYERS = 2                   # number of (Linear, LayerNorm) pairs
LN_EPS = float(HIDDEN)                # LayerNorm(hidden_size, hidden_size) -> eps = hidden_size
N_LN = 2 + N_HIDDEN_LAYERS            # LayerNorm'd linear layers (linear1, linear2, hidden...)


def _round_up(n, m):
    return ((n + m - 1) // m) * m


VECS_ROWS = _round_up(3 * N_LN, 8)    # [b, gamma, beta] rows per LN layer, sublane-padded
WO_ROWS = _round_up(HIDDEN + 1, 8)    # wo rows + 1 bias row, sublane-padded


def _choose_tile_m(batch):
    """Small batches: one tile, rounded up to the f32 sublane multiple (8).
    Large batches: 256-row tiles (>=2 tiles -> both v7x TCs; vregs stay bounded)."""
    if batch <= 256:
        return _round_up(batch, 8)
    return 256


# ---------------- Pallas kernel -----------------------------------------------
def ddpg_actor_kernel(x_ref, w1_ref, wh_ref, vecs_ref, wo_ref, out_ref):
    """One batch tile of the full DDPGActor forward.

    x_ref    : (TILE_M, OBS_SIZE)                   native-width obs rows
    w1_ref   : (OBS_SIZE, HIDDEN)                   linear1 weight
    wh_ref   : (1+N_HIDDEN_LAYERS, HIDDEN, HIDDEN)  [w2, wh_0, wh_1, ...]
    vecs_ref : (VECS_ROWS, HIDDEN)                  rows = [b, gamma, beta] per LN layer
    wo_ref   : (WO_ROWS, ACT_SIZE)                  rows 0..HIDDEN-1 = wo, row HIDDEN = bo
    out_ref  : (TILE_M, ACT_SIZE)
    """
    inv_h = 1.0 / HIDDEN

    def ln_block(h, layer, relu_after_linear):
        # bias + (optional) relu + LayerNorm(eps=HIDDEN) + relu
        b = vecs_ref[3 * layer + 0: 3 * layer + 1, :]     # (1, HIDDEN)
        g = vecs_ref[3 * layer + 1: 3 * layer + 2, :]     # (1, HIDDEN)
        be = vecs_ref[3 * layer + 2: 3 * layer + 3, :]    # (1, HIDDEN)
        t = h + b
        if relu_after_linear:
            t = jnp.maximum(t, 0.0)
        # one-pass stats: the two cross-lane reductions are independent (XLU slot)
        s = jnp.sum(t, axis=-1, keepdims=True)
        s2 = jnp.sum(t * t, axis=-1, keepdims=True)
        mu = s * inv_h
        var = jnp.maximum(s2 * inv_h - mu * mu, 0.0)      # cheap (TILE_M,1) clamp
        rstd = jax.lax.rsqrt(var + LN_EPS)                # EUP slot
        # folded affine: one scale, one shift, one fused max
        scale = rstd * g
        shift = be - mu * scale
        return jnp.maximum(t * scale + shift, 0.0)

    x = x_ref[...]                                        # (TILE_M, OBS_SIZE)

    # linear1 -> norm1 -> relu
    h = jnp.dot(x, w1_ref[...], preferred_element_type=jnp.float32)
    h = ln_block(h, 0, relu_after_linear=False)

    # linear2 -> norm2 -> relu
    h = jnp.dot(h, wh_ref[0], preferred_element_type=jnp.float32)
    h = ln_block(h, 1, relu_after_linear=False)

    # hidden ModuleList: relu(Linear(x)) then relu(LayerNorm(x)) per pair
    for i in range(N_HIDDEN_LAYERS):
        h = jnp.dot(h, wh_ref[1 + i], preferred_element_type=jnp.float32)
        h = ln_block(h, 2 + i, relu_after_linear=True)

    # linear_out (no activation) — native ACT_SIZE-wide write, no lane padding
    wo = wo_ref[0:HIDDEN, :]                              # (HIDDEN, ACT_SIZE)
    bo = wo_ref[HIDDEN:HIDDEN + 1, :]                     # (1, ACT_SIZE)
    out_ref[...] = jnp.dot(h, wo, preferred_element_type=jnp.float32) + bo


# ---------------- wrapper ------------------------------------------------------
def ddpg_actor_forward(x, packed_params):
    """x: (batch, OBS_SIZE) float32 -> (batch, ACT_SIZE) float32."""
    w1, w_hid, vecs, wo_packed = packed_params
    batch = x.shape[0]
    tile_m = _choose_tile_m(batch)
    n_tiles = pl.cdiv(batch, tile_m)
    b_pad = n_tiles * tile_m

    x_in = x
    if b_pad != batch:
        # only pad the (small) batch remainder; lanes stay at native OBS_SIZE
        x_in = jnp.pad(x, ((0, b_pad - batch), (0, 0)))

    out = pl.pallas_call(
        ddpg_actor_kernel,
        out_shape=jax.ShapeDtypeStruct((b_pad, ACT_SIZE), jnp.float32),
        grid=(n_tiles,),
        in_specs=[
            pl.BlockSpec((tile_m, OBS_SIZE), lambda i: (i, 0)),                 # x tile (native width)
            pl.BlockSpec((OBS_SIZE, HIDDEN), lambda i: (0, 0)),                 # w1
            pl.BlockSpec((1 + N_HIDDEN_LAYERS, HIDDEN, HIDDEN),
                         lambda i: (0, 0, 0)),                                  # hidden weights
            pl.BlockSpec((VECS_ROWS, HIDDEN), lambda i: (0, 0)),                # all b/gamma/beta
            pl.BlockSpec((WO_ROWS, ACT_SIZE), lambda i: (0, 0)),                # wo (+ bo row)
        ],
        out_specs=pl.BlockSpec((tile_m, ACT_SIZE), lambda i: (i, 0)),
        compiler_params=pltpu.CompilerParams(
            dimension_semantics=("parallel",)),
    )(x_in, w1, w_hid, vecs, wo_packed)

    if b_pad != batch:
        out = out[:batch]
    return out


# ---------------- deterministic parameter init (PyTorch-style) -----------------
def init_raw_params(key):
    """Raw (unpacked) params, weights stored as (in, out)."""
    def linear_init(k, fan_in, fan_out):
        kw, kb = jax.random.split(k)
        bound = 1.0 / jnp.sqrt(fan_in)
        w = jax.random.uniform(kw, (fan_in, fan_out), jnp.float32, -bound, bound)
        b = jax.random.uniform(kb, (fan_out,), jnp.float32, -bound, bound)
        return w, b

    keys = jax.random.split(key, 3 + N_HIDDEN_LAYERS)

    w1, b1 = linear_init(keys[0], OBS_SIZE, HIDDEN)
    g1, be1 = jnp.ones((HIDDEN,), jnp.float32), jnp.zeros((HIDDEN,), jnp.float32)

    w2, b2 = linear_init(keys[1], HIDDEN, HIDDEN)
    g2, be2 = jnp.ones((HIDDEN,), jnp.float32), jnp.zeros((HIDDEN,), jnp.float32)

    wh, bh, gh, beh = [], [], [], []
    for i in range(N_HIDDEN_LAYERS):
        wi, bi = linear_init(keys[2 + i], HIDDEN, HIDDEN)
        wh.append(wi)
        bh.append(bi)
        gh.append(jnp.ones((HIDDEN,), jnp.float32))
        beh.append(jnp.zeros((HIDDEN,), jnp.float32))

    wo, bo = linear_init(keys[2 + N_HIDDEN_LAYERS], HIDDEN, ACT_SIZE)
    wo = wo * 0.1                                          # .weight.data.mul_(0.1)
    bo = bo * 0.1                                          # .bias.data.mul_(0.1)

    return dict(w1=w1, b1=b1, g1=g1, be1=be1,
                w2=w2, b2=b2, g2=g2, be2=be2,
                wh=wh, bh=bh, gh=gh, beh=beh,
                wo=wo, bo=bo)


def pack_params(p):
    """Pack raw params into the 4 kernel operands."""
    # w1 kept at its native (OBS_SIZE, HIDDEN)
    w1 = p["w1"].astype(jnp.float32)

    # stacked hidden-width weights: [w2, wh_0, wh_1, ...]
    w_hid = jnp.stack([p["w2"]] + list(p["wh"]), axis=0)   # (1+N_HIDDEN_LAYERS, H, H)

    # all per-LN-layer vectors: rows = [b, gamma, beta] x N_LN layers, sublane-padded
    rows = [p["b1"], p["g1"], p["be1"], p["b2"], p["g2"], p["be2"]]
    for i in range(N_HIDDEN_LAYERS):
        rows += [p["bh"][i], p["gh"][i], p["beh"][i]]
    vecs_raw = jnp.stack(rows, axis=0)                      # (3*N_LN, HIDDEN)
    vecs = jnp.zeros((VECS_ROWS, HIDDEN), jnp.float32).at[:vecs_raw.shape[0]].set(vecs_raw)

    # wo with bo packed as an extra row, sublane-padded to a multiple of 8 rows
    wo_packed = jnp.zeros((WO_ROWS, ACT_SIZE), jnp.float32)
    wo_packed = wo_packed.at[:HIDDEN, :].set(p["wo"])
    wo_packed = wo_packed.at[HIDDEN, :].set(p["bo"])

    return (w1, w_hid, vecs, wo_packed)


# ---------------- pure-JAX reference for sanity --------------------------------
def reference_forward(x, p):
    def ln(h, g, b):
        mu = jnp.mean(h, axis=-1, keepdims=True)
        var = jnp.mean((h - mu) ** 2, axis=-1, keepdims=True)
        return (h - mu) / jnp.sqrt(var + LN_EPS) * g + b

    h = x @ p["w1"] + p["b1"]
    h = jnp.maximum(ln(h, p["g1"], p["be1"]), 0.0)
    h = h @ p["w2"] + p["b2"]
    h = jnp.maximum(ln(h, p["g2"], p["be2"]), 0.0)
    for i in range(N_HIDDEN_LAYERS):
        h = jnp.maximum(h @ p["wh"][i] + p["bh"][i], 0.0)
        h = jnp.maximum(ln(h, p["gh"][i], p["beh"][i]), 0.0)
    return h @ p["wo"] + p["bo"]


if __name__ == "__main__":
    key = jax.random.PRNGKey(0)
    k_x, k_p = jax.random.split(key)

    x = jax.random.normal(k_x, (BATCH, OBS_SIZE), jnp.float32)
    raw = init_raw_params(k_p)
    packed = pack_params(raw)

    out = ddpg_actor_forward(x, packed)
    out = jax.block_until_ready(out)

    ref = reference_forward(x, raw)
    assert out.shape == (BATCH, ACT_SIZE)
    assert jnp.allclose(out, ref, atol=1e-4, rtol=1e-4), float(jnp.max(jnp.abs(out - ref)))

    print("KERNEL_OK")
</pallas_src>

<mosaic_0001>
module attributes {stable_mosaic.version = 11 : i64} {
  func.func @ddpg_actor_kernel(%arg0: i32, %arg1: memref<8x16xf32, #tpu.memory_space<vmem>>, %arg2: memref<16x32xf32, #tpu.memory_space<vmem>>, %arg3: memref<3x32x32xf32, #tpu.memory_space<vmem>>, %arg4: memref<16x32xf32, #tpu.memory_space<vmem>>, %arg5: memref<40x4xf32, #tpu.memory_space<vmem>>, %arg6: memref<8x4xf32, #tpu.memory_space<vmem>>) attributes {dimension_semantics = [#tpu.dimension_semantics<parallel>], iteration_bounds = array<i64: 1>, scalar_prefetch = 0 : i64, scratch_operands = 0 : i64, tpu.core_type = #tpu.core_type<tc>, window_params = [{transform_indices = @transform_0, window_bounds = array<i64: 8, 16>}, {pipeline_mode = #tpu.pipeline_mode<synchronous>, transform_indices = @transform_1, window_bounds = array<i64: 16, 32>}, {pipeline_mode = #tpu.pipeline_mode<synchronous>, transform_indices = @transform_2, window_bounds = array<i64: 3, 32, 32>}, {pipeline_mode = #tpu.pipeline_mode<synchronous>, transform_indices = @transform_3, window_bounds = array<i64: 16, 32>}, {pipeline_mode = #tpu.pipeline_mode<synchronous>, transform_indices = @transform_4, window_bounds = array<i64: 40, 4>}, {transform_indices = @transform_5, window_bounds = array<i64: 8, 4>}]} {
    %c0 = arith.constant 0 : index
    %c0_0 = arith.constant 0 : index
    %0 = vector.load %arg1[%c0, %c0_0] : memref<8x16xf32, #tpu.memory_space<vmem>>, vector<8x16xf32>
    %c0_1 = arith.constant 0 : index
    %c0_2 = arith.constant 0 : index
    %1 = vector.load %arg2[%c0_1, %c0_2] : memref<16x32xf32, #tpu.memory_space<vmem>>, vector<16x32xf32>
    %cst = arith.constant dense<0.000000e+00> : vector<8x32xf32>
    %2 = tpu.matmul %0, %1, %cst {dimension_numbers = #tpu.dot_dimension_numbers<[1], [0], [0], [1], [0, 0, 1, 1], [], []>} : vector<8x16xf32>, vector<16x32xf32>, vector<8x32xf32> -> vector<8x32xf32>
    %c0_3 = arith.constant 0 : index
    %c0_4 = arith.constant 0 : index
    %3 = vector.load %arg4[%c0_3, %c0_4] : memref<16x32xf32, #tpu.memory_space<vmem>>, vector<1x32xf32>
    %c1 = arith.constant 1 : index
    %c0_5 = arith.constant 0 : index
    %4 = vector.load %arg4[%c1, %c0_5] : memref<16x32xf32, #tpu.memory_space<vmem>>, vector<1x32xf32>
    %c2 = arith.constant 2 : index
    %c0_6 = arith.constant 0 : index
    %5 = vector.load %arg4[%c2, %c0_6] : memref<16x32xf32, #tpu.memory_space<vmem>>, vector<1x32xf32>
    %6 = vector.broadcast %3 : vector<1x32xf32> to vector<8x32xf32>
    %7 = arith.addf %2, %6 : vector<8x32xf32>
    %cst_7 = arith.constant dense<0.000000e+00> : vector<8xf32>
    %8 = vector.multi_reduction <add>, %7, %cst_7 [1] : vector<8x32xf32> to vector<8xf32>
    %9 = vector.shape_cast %8 : vector<8xf32> to vector<8x1xf32>
    %10 = arith.mulf %7, %7 : vector<8x32xf32>
    %cst_8 = arith.constant dense<0.000000e+00> : vector<8xf32>
    %11 = vector.multi_reduction <add>, %10, %cst_8 [1] : vector<8x32xf32> to vector<8xf32>
    %12 = vector.shape_cast %11 : vector<8xf32> to vector<8x1xf32>
    %cst_9 = arith.constant 3.125000e-02 : f32
    %13 = vector.broadcast %cst_9 : f32 to vector<8x1xf32>
    %14 = arith.mulf %9, %13 : vector<8x1xf32>
    %cst_10 = arith.constant 3.125000e-02 : f32
    %15 = vector.broadcast %cst_10 : f32 to vector<8x1xf32>
    %16 = arith.mulf %12, %15 : vector<8x1xf32>
    %17 = arith.mulf %14, %14 : vector<8x1xf32>
    %18 = arith.subf %16, %17 : vector<8x1xf32>
    %cst_11 = arith.constant 0.000000e+00 : f32
    %19 = vector.broadcast %cst_11 : f32 to vector<8x1xf32>
    %20 = arith.maximumf %18, %19 : vector<8x1xf32>
    %cst_12 = arith.constant 3.200000e+01 : f32
    %21 = vector.broadcast %cst_12 : f32 to vector<8x1xf32>
    %22 = arith.addf %20, %21 : vector<8x1xf32>
    %23 = math.rsqrt %22 : vector<8x1xf32>
    %24 = vector.broadcast %23 : vector<8x1xf32> to vector<8x32xf32>
    %25 = vector.broadcast %4 : vector<1x32xf32> to vector<8x32xf32>
    %26 = arith.mulf %24, %25 : vector<8x32xf32>
    %27 = vector.broadcast %14 : vector<8x1xf32> to vector<8x32xf32>
    %28 = arith.mulf %27, %26 : vector<8x32xf32>
    %29 = vector.broadcast %5 : vector<1x32xf32> to vector<8x32xf32>
    %30 = arith.subf %29, %28 : vector<8x32xf32>
    %31 = arith.mulf %7, %26 : vector<8x32xf32>
    %32 = arith.addf %31, %30 : vector<8x32xf32>
    %cst_13 = arith.constant 0.000000e+00 : f32
    %33 = vector.broadcast %cst_13 : f32 to vector<8x32xf32>
    %34 = arith.maximumf %32, %33 : vector<8x32xf32>
    %c0_14 = arith.constant 0 : index
    %c0_15 = arith.constant 0 : index
    %c0_16 = arith.constant 0 : index
    %35 = vector.load %arg3[%c0_14, %c0_15, %c0_16] : memref<3x32x32xf32, #tpu.memory_space<vmem>>, vector<1x32x32xf32>
    %36 = vector.shape_cast %35 : vector<1x32x32xf32> to vector<32x32xf32>
    %cst_17 = arith.constant dense<0.000000e+00> : vector<8x32xf32>
    %37 = tpu.matmul %34, %36, %cst_17 {dimension_numbers = #tpu.dot_dimension_numbers<[1], [0], [0], [1], [0, 0, 1, 1], [], []>} : vector<8x32xf32>, vector<32x32xf32>, vector<8x32xf32> -> vector<8x32xf32>
    %c3 = arith.constant 3 : index
    %c0_18 = arith.constant 0 : index
    %38 = vector.load %arg4[%c3, %c0_18] : memref<16x32xf32, #tpu.memory_space<vmem>>, vector<1x32xf32>
    %c4 = arith.constant 4 : index
    %c0_19 = arith.constant 0 : index
    %39 = vector.load %arg4[%c4, %c0_19] : memref<16x32xf32, #tpu.memory_space<vmem>>, vector<1x32xf32>
    %c5 = arith.constant 5 : index
    %c0_20 = arith.constant 0 : index
    %40 = vector.load %arg4[%c5, %c0_20] : memref<16x32xf32, #tpu.memory_space<vmem>>, vector<1x32xf32>
    %41 = vector.broadcast %38 : vector<1x32xf32> to vector<8x32xf32>
    %42 = arith.addf %37, %41 : vector<8x32xf32>
    %cst_21 = arith.constant dense<0.000000e+00> : vector<8xf32>
    %43 = vector.multi_reduction <add>, %42, %cst_21 [1] : vector<8x32xf32> to vector<8xf32>
    %44 = vector.shape_cast %43 : vector<8xf32> to vector<8x1xf32>
    %45 = arith.mulf %42, %42 : vector<8x32xf32>
    %cst_22 = arith.constant dense<0.000000e+00> : vector<8xf32>
    %46 = vector.multi_reduction <add>, %45, %cst_22 [1] : vector<8x32xf32> to vector<8xf32>
    %47 = vector.shape_cast %46 : vector<8xf32> to vector<8x1xf32>
    %cst_23 = arith.constant 3.125000e-02 : f32
    %48 = vector.broadcast %cst_23 : f32 to vector<8x1xf32>
    %49 = arith.mulf %44, %48 : vector<8x1xf32>
    %cst_24 = arith.constant 3.125000e-02 : f32
    %50 = vector.broadcast %cst_24 : f32 to vector<8x1xf32>
    %51 = arith.mulf %47, %50 : vector<8x1xf32>
    %52 = arith.mulf %49, %49 : vector<8x1xf32>
    %53 = arith.subf %51, %52 : vector<8x1xf32>
    %cst_25 = arith.constant 0.000000e+00 : f32
    %54 = vector.broadcast %cst_25 : f32 to vector<8x1xf32>
    %55 = arith.maximumf %53, %54 : vector<8x1xf32>
    %cst_26 = arith.constant 3.200000e+01 : f32
    %56 = vector.broadcast %cst_26 : f32 to vector<8x1xf32>
    %57 = arith.addf %55, %56 : vector<8x1xf32>
    %58 = math.rsqrt %57 : vector<8x1xf32>
    %59 = vector.broadcast %58 : vector<8x1xf32> to vector<8x32xf32>
    %60 = vector.broadcast %39 : vector<1x32xf32> to vector<8x32xf32>
    %61 = arith.mulf %59, %60 : vector<8x32xf32>
    %62 = vector.broadcast %49 : vector<8x1xf32> to vector<8x32xf32>
    %63 = arith.mulf %62, %61 : vector<8x32xf32>
    %64 = vector.broadcast %40 : vector<1x32xf32> to vector<8x32xf32>
    %65 = arith.subf %64, %63 : vector<8x32xf32>
    %66 = arith.mulf %42, %61 : vector<8x32xf32>
    %67 = arith.addf %66, %65 : vector<8x32xf32>
    %cst_27 = arith.constant 0.000000e+00 : f32
    %68 = vector.broadcast %cst_27 : f32 to vector<8x32xf32>
    %69 = arith.maximumf %67, %68 : vector<8x32xf32>
    %c1_28 = arith.constant 1 : index
    %c0_29 = arith.constant 0 : index
    %c0_30 = arith.constant 0 : index
    %70 = vector.load %arg3[%c1_28, %c0_29, %c0_30] : memref<3x32x32xf32, #tpu.memory_space<vmem>>, vector<1x32x32xf32>
    %71 = vector.shape_cast %70 : vector<1x32x32xf32> to vector<32x32xf32>
    %cst_31 = arith.constant dense<0.000000e+00> : vector<8x32xf32>
    %72 = tpu.matmul %69, %71, %cst_31 {dimension_numbers = #tpu.dot_dimension_numbers<[1], [0], [0], [1], [0, 0, 1, 1], [], []>} : vector<8x32xf32>, vector<32x32xf32>, vector<8x32xf32> -> vector<8x32xf32>
    %c6 = arith.constant 6 : index
    %c0_32 = arith.constant 0 : index
    %73 = vector.load %arg4[%c6, %c0_32] : memref<16x32xf32, #tpu.memory_space<vmem>>, vector<1x32xf32>
    %c7 = arith.constant 7 : index
    %c0_33 = arith.constant 0 : index
    %74 = vector.load %arg4[%c7, %c0_33] : memref<16x32xf32, #tpu.memory_space<vmem>>, vector<1x32xf32>
    %c8 = arith.constant 8 : index
    %c0_34 = arith.constant 0 : index
    %75 = vector.load %arg4[%c8, %c0_34] : memref<16x32xf32, #tpu.memory_space<vmem>>, vector<1x32xf32>
    %76 = vector.broadcast %73 : vector<1x32xf32> to vector<8x32xf32>
    %77 = arith.addf %72, %76 : vector<8x32xf32>
    %cst_35 = arith.constant 0.000000e+00 : f32
    %78 = vector.broadcast %cst_35 : f32 to vector<8x32xf32>
    %79 = arith.maximumf %77, %78 : vector<8x32xf32>
    %cst_36 = arith.constant dense<0.000000e+00> : vector<8xf32>
    %80 = vector.multi_reduction <add>, %79, %cst_36 [1] : vector<8x32xf32> to vector<8xf32>
    %81 = vector.shape_cast %80 : vector<8xf32> to vector<8x1xf32>
    %82 = arith.mulf %79, %79 : vector<8x32xf32>
    %cst_37 = arith.constant dense<0.000000e+00> : vector<8xf32>
    %83 = vector.multi_reduction <add>, %82, %cst_37 [1] : vector<8x32xf32> to vector<8xf32>
    %84 = vector.shape_cast %83 : vector<8xf32> to vector<8x1xf32>
    %cst_38 = arith.constant 3.125000e-02 : f32
    %85 = vector.broadcast %cst_38 : f32 to vector<8x1xf32>
    %86 = arith.mulf %81, %85 : vector<8x1xf32>
    %cst_39 = arith.constant 3.125000e-02 : f32
    %87 = vector.broadcast %cst_39 : f32 to vector<8x1xf32>
    %88 = arith.mulf %84, %87 : vector<8x1xf32>
    %89 = arith.mulf %86, %86 : vector<8x1xf32>
    %90 = arith.subf %88, %89 : vector<8x1xf32>
    %cst_40 = arith.constant 0.000000e+00 : f32
    %91 = vector.broadcast %cst_40 : f32 to vector<8x1xf32>
    %92 = arith.maximumf %90, %91 : vector<8x1xf32>
    %cst_41 = arith.constant 3.200000e+01 : f32
    %93 = vector.broadcast %cst_41 : f32 to vector<8x1xf32>
    %94 = arith.addf %92, %93 : vector<8x1xf32>
    %95 = math.rsqrt %94 : vector<8x1xf32>
    %96 = vector.broadcast %95 : vector<8x1xf32> to vector<8x32xf32>
    %97 = vector.broadcast %74 : vector<1x32xf32> to vector<8x32xf32>
    %98 = arith.mulf %96, %97 : vector<8x32xf32>
    %99 = vector.broadcast %86 : vector<8x1xf32> to vector<8x32xf32>
    %100 = arith.mulf %99, %98 : vector<8x32xf32>
    %101 = vector.broadcast %75 : vector<1x32xf32> to vector<8x32xf32>
    %102 = arith.subf %101, %100 : vector<8x32xf32>
    %103 = arith.mulf %79, %98 : vector<8x32xf32>
    %104 = arith.addf %103, %102 : vector<8x32xf32>
    %cst_42 = arith.constant 0.000000e+00 : f32
    %105 = vector.broadcast %cst_42 : f32 to vector<8x32xf32>
    %106 = arith.maximumf %104, %105 : vector<8x32xf32>
    %c2_43 = arith.constant 2 : index
    %c0_44 = arith.constant 0 : index
    %c0_45 = arith.constant 0 : index
    %107 = vector.load %arg3[%c2_43, %c0_44, %c0_45] : memref<3x32x32xf32, #tpu.memory_space<vmem>>, vector<1x32x32xf32>
    %108 = vector.shape_cast %107 : vector<1x32x32xf32> to vector<32x32xf32>
    %cst_46 = arith.constant dense<0.000000e+00> : vector<8x32xf32>
    %109 = tpu.matmul %106, %108, %cst_46 {dimension_numbers = #tpu.dot_dimension_numbers<[1], [0], [0], [1], [0, 0, 1, 1], [], []>} : vector<8x32xf32>, vector<32x32xf32>, vector<8x32xf32> -> vector<8x32xf32>
    %c9 = arith.constant 9 : index
    %c0_47 = arith.constant 0 : index
    %110 = vector.load %arg4[%c9, %c0_47] : memref<16x32xf32, #tpu.memory_space<vmem>>, vector<1x32xf32>
    %c10 = arith.constant 10 : index
    %c0_48 = arith.constant 0 : index
    %111 = vector.load %arg4[%c10, %c0_48] : memref<16x32xf32, #tpu.memory_space<vmem>>, vector<1x32xf32>
    %c11 = arith.constant 11 : index
    %c0_49 = arith.constant 0 : index
    %112 = vector.load %arg4[%c11, %c0_49] : memref<16x32xf32, #tpu.memory_space<vmem>>, vector<1x32xf32>
    %113 = vector.broadcast %110 : vector<1x32xf32> to vector<8x32xf32>
    %114 = arith.addf %109, %113 : vector<8x32xf32>
    %cst_50 = arith.constant 0.000000e+00 : f32
    %115 = vector.broadcast %cst_50 : f32 to vector<8x32xf32>
    %116 = arith.maximumf %114, %115 : vector<8x32xf32>
    %cst_51 = arith.constant dense<0.000000e+00> : vector<8xf32>
    %117 = vector.multi_reduction <add>, %116, %cst_51 [1] : vector<8x32xf32> to vector<8xf32>
    %118 = vector.shape_cast %117 : vector<8xf32> to vector<8x1xf32>
    %119 = arith.mulf %116, %116 : vector<8x32xf32>
    %cst_52 = arith.constant dense<0.000000e+00> : vector<8xf32>
    %120 = vector.multi_reduction <add>, %119, %cst_52 [1] : vector<8x32xf32> to vector<8xf32>
    %121 = vector.shape_cast %120 : vector<8xf32> to vector<8x1xf32>
    %cst_53 = arith.constant 3.125000e-02 : f32
    %122 = vector.broadcast %cst_53 : f32 to vector<8x1xf32>
    %123 = arith.mulf %118, %122 : vector<8x1xf32>
    %cst_54 = arith.constant 3.125000e-02 : f32
    %124 = vector.broadcast %cst_54 : f32 to vector<8x1xf32>
    %125 = arith.mulf %121, %124 : vector<8x1xf32>
    %126 = arith.mulf %123, %123 : vector<8x1xf32>
    %127 = arith.subf %125, %126 : vector<8x1xf32>
    %cst_55 = arith.constant 0.000000e+00 : f32
    %128 = vector.broadcast %cst_55 : f32 to vector<8x1xf32>
    %129 = arith.maximumf %127, %128 : vector<8x1xf32>
    %cst_56 = arith.constant 3.200000e+01 : f32
    %130 = vector.broadcast %cst_56 : f32 to vector<8x1xf32>
    %131 = arith.addf %129, %130 : vector<8x1xf32>
    %132 = math.rsqrt %131 : vector<8x1xf32>
    %133 = vector.broadcast %132 : vector<8x1xf32> to vector<8x32xf32>
    %134 = vector.broadcast %111 : vector<1x32xf32> to vector<8x32xf32>
    %135 = arith.mulf %133, %134 : vector<8x32xf32>
    %136 = vector.broadcast %123 : vector<8x1xf32> to vector<8x32xf32>
    %137 = arith.mulf %136, %135 : vector<8x32xf32>
    %138 = vector.broadcast %112 : vector<1x32xf32> to vector<8x32xf32>
    %139 = arith.subf %138, %137 : vector<8x32xf32>
    %140 = arith.mulf %116, %135 : vector<8x32xf32>
    %141 = arith.addf %140, %139 : vector<8x32xf32>
    %cst_57 = arith.constant 0.000000e+00 : f32
    %142 = vector.broadcast %cst_57 : f32 to vector<8x32xf32>
    %143 = arith.maximumf %141, %142 : vector<8x32xf32>
    %c0_58 = arith.constant 0 : index
    %c0_59 = arith.constant 0 : index
    %144 = vector.load %arg5[%c0_58, %c0_59] : memref<40x4xf32, #tpu.memory_space<vmem>>, vector<32x4xf32>
    %c32 = arith.constant 32 : index
    %c0_60 = arith.constant 0 : index
    %145 = vector.load %arg5[%c32, %c0_60] : memref<40x4xf32, #tpu.memory_space<vmem>>, vector<1x4xf32>
    %cst_61 = arith.constant dense<0.000000e+00> : vector<8x4xf32>
    %146 = tpu.matmul %143, %144, %cst_61 {dimension_numbers = #tpu.dot_dimension_numbers<[1], [0], [0], [1], [0, 0, 1, 1], [], []>} : vector<8x32xf32>, vector<32x4xf32>, vector<8x4xf32> -> vector<8x4xf32>
    %147 = vector.broadcast %145 : vector<1x4xf32> to vector<8x4xf32>
    %148 = arith.addf %146, %147 : vector<8x4xf32>
    %c0_62 = arith.constant 0 : index
    %c0_63 = arith.constant 0 : index
    %149 = vector.load %arg6[%c0_62, %c0_63] : memref<8x4xf32, #tpu.memory_space<vmem>>, vector<8x4xf32>
    tpu.vector_store %arg6[%c0_62, %c0_63], %148 {strides = array<i32>} : memref<8x4xf32, #tpu.memory_space<vmem>>, vector<8x4xf32>,
    return
  }
  func.func @transform_0(%arg0: i32) -> (i32, i32) {
    %c0_i32 = arith.constant 0 : i32
    %c0_i32_0 = arith.constant 0 : i32
    return %arg0, %c0_i32 : i32, i32
  }
  func.func @transform_1(%arg0: i32) -> (i32, i32) {
    %c0_i32 = arith.constant 0 : i32
    %c0_i32_0 = arith.constant 0 : i32
    %c0_i32_1 = arith.constant 0 : i32
    return %c0_i32, %c0_i32_0 : i32, i32
  }
  func.func @transform_2(%arg0: i32) -> (i32, i32, i32) {
    %c0_i32 = arith.constant 0 : i32
    %c0_i32_0 = arith.constant 0 : i32
    %c0_i32_1 = arith.constant 0 : i32
    %c0_i32_2 = arith.constant 0 : i32
    return %c0_i32, %c0_i32_0, %c0_i32_1 : i32, i32, i32
  }
  func.func @transform_3(%arg0: i32) -> (i32, i32) {
    %c0_i32 = arith.constant 0 : i32
    %c0_i32_0 = arith.constant 0 : i32
    %c0_i32_1 = arith.constant 0 : i32
    return %c0_i32, %c0_i32_0 : i32, i32
  }
  func.func @transform_4(%arg0: i32) -> (i32, i32) {
    %c0_i32 = arith.constant 0 : i32
    %c0_i32_0 = arith.constant 0 : i32
    %c0_i32_1 = arith.constant 0 : i32
    return %c0_i32, %c0_i32_0 : i32, i32
  }
  func.func @transform_5(%arg0: i32) -> (i32, i32) {
    %c0_i32 = arith.constant 0 : i32
    %c0_i32_0 = arith.constant 0 : i32
    return %arg0, %c0_i32 : i32, i32
  }
}

</mosaic_0001>

<llo_original>
// kernel: tpu_custom_call.1
$region0: #{tpu_custom_call.1}
  #allocation0 [shape = 'u32[]', space=smem, size = 0x4, offset = 0x4, fixed_abs, tag = 'smem constant byte address 0x4 - core index']
  #allocation1 [shape = 'u32[144,128]{1,0:T(1,128)}', space=vmem, size = 0x12000, scoped, tag = 'internal scratch']
  %s0 = inlined_call_operand.vmem [shape: f32[8,16], index: 0, kind: input, shape index: {}]
  %s1 = inlined_call_operand.vmem [shape: f32[16,32], index: 1, kind: input, shape index: {}]
  %s2 = inlined_call_operand.hbm [shape: f32[3,32,32], index: 2, kind: input, shape index: {}]
  %s3 = inlined_call_operand.vmem [shape: f32[16,32], index: 3, kind: input, shape index: {}]
  %s4 = inlined_call_operand.vmem [shape: f32[40,4], index: 4, kind: input, shape index: {}]
  %s5 = inlined_call_operand.vmem [shape: f32[8,4], index: 5, kind: output, shape index: {}]
  %s6 = sld [smem:[#allocation0]]
  $region34: #{tpu_custom_call.1} parent=0
    _
  %s8 = ssub.s32 1, %s6
  %s9 = scalar_select 0, %s8, %s6
  $region1: #{tpu_custom_call.1} parent=0
    #allocation2 [shape = 'u8[49152]{0}', space=vmem, size = 0xc000, scoped, tag = 'input window, operand 2, single buffered']
    #allocation3 [shape = 's32[1]{0}', space=sflag, size = 0x4, scoped, tag = 'scoped memory for tpu_custom_call.1']
    %10 = vsyncpa [#allocation3], 0
    // Predicated region
    $region2: #{tpu_custom_call.1} parent=1 // pred_check
      _
    $region3: #{tpu_custom_call.1} parent=1 // pred_check_branch
      %12 = sbr.rel (0) target = $region5
    $region4: #{tpu_custom_call.1} parent=1 // pred_region
      _
    $region5: #{tpu_custom_call.1} parent=1 // pred_fallthru
      _
    // Predicated region
    $region6: #{tpu_custom_call.1} parent=1 // pred_check
      _
    $region7: #{tpu_custom_call.1} parent=1 // pred_check_branch
      %14 = sbr.rel (0) target = $region9
    $region8: #{tpu_custom_call.1} parent=1 // pred_region
      _
    $region9: #{tpu_custom_call.1} parent=1 // pred_fallthru
      _
    // Predicated region
    $region10: #{tpu_custom_call.1} parent=1 // pred_check
      _
    $region11: #{tpu_custom_call.1} parent=1 // pred_check_branch
      %16 = sbr.rel (0) target = $region13
    $region12: #{tpu_custom_call.1} parent=1 // pred_region
      %s18 = ssub.s32 1536, 1536
      %19 = vsyncadd [#allocation3], %s18
      %s20 = sshll.u32 [#allocation2], 4
      %s21 = int_to_ptr.vmem [resolvable:$true] %s20
      %26 = dma.hbm_to_vmem [thread:$0]  %s2, 1536, %s21, [#allocation3], 128, 128, 8
    $region13: #{tpu_custom_call.1} parent=1 // pred_fallthru
      _
    // Predicated region
    $region14: #{tpu_custom_call.1} parent=1 // pred_check
      _
    $region15: #{tpu_custom_call.1} parent=1 // pred_check_branch
      %28 = sbr.rel (0) target = $region17
    $region16: #{tpu_custom_call.1} parent=1 // pred_region
      _
    $region17: #{tpu_custom_call.1} parent=1 // pred_fallthru
      _
    // Predicated region
    $region18: #{tpu_custom_call.1} parent=1 // pred_check
      _
    $region19: #{tpu_custom_call.1} parent=1 // pred_check_branch
      %30 = sbr.rel (0) target = $region21
    $region20: #{tpu_custom_call.1} parent=1 // pred_region
      _
    $region21: #{tpu_custom_call.1} parent=1 // pred_fallthru
      _
    // Predicated region
    $region22: #{tpu_custom_call.1} parent=1 // pred_check
      _
    $region23: #{tpu_custom_call.1} parent=1 // pred_check_branch
      %32 = sbr.rel (0) target = $region25
    $region24: #{tpu_custom_call.1} parent=1 // pred_region
      %33 = dma.done [#allocation3], 1536
    $region25: #{tpu_custom_call.1} parent=1 // pred_fallthru
      _
    %v34 = vld [vmem:[%s0] sm:$0xff]
    %v35 = vld [vmem:[%s1] sm:$0xff]
    %v36 = vld [vmem:[%s1 + $0x8] sm:$0xff]
    %v37 = vld [vmem:[%s3] sm:$0x1]
    %v38 = vld [vmem:[%s3 + $0x1] sm:$0x1]
    %v39 = vld [vmem:[%s3 + $0x2] sm:$0x1]
    %v40 = vlaneseq
    %v41 = vshrl.u32 %v40, 7
    %v42 = vsub.s32 0, %v41
    %v43 = vrot.slane %v37, %v42
    %vm44 = vcmask 130048
    %v46 = vsel %vm44, %v34, 0
    %48 = vmatprep.subr.mxu0 0.0
    %49 = vmatpush1.msra.mxu0 %v35
    %50 = vmatprep.subr.mxu0 0.0
    %51 = vmatpush1.msra.mxu0 %v36
    %52 = vmatprep.subr.mxu0 0.0
    %53 = vmatpush1.msra.mxu0 0.0
    %54 = vmatprep.subr.mxu0 0.0
    %55 = vmatpush1.msra.mxu0 0.0
    %56 = vmatprep.subr.mxu0 0.0
    %57 = vmatpush1.msra.mxu0 0.0
    %58 = vmatprep.subr.mxu0 0.0
    %59 = vmatpush1.msra.mxu0 0.0
    %60 = vmatprep.subr.mxu0 0.0
    %61 = vmatpush1.msra.mxu0 0.0
    %62 = vmatprep.subr.mxu0 0.0
    %63 = vmatpush1.msra.mxu0 0.0
    %64 = vmatprep.subr.mxu0 0.0
    %65 = vmatpush1.msra.mxu0 0.0
    %66 = vmatprep.subr.mxu0 0.0
    %67 = vmatpush1.msra.mxu0 0.0
    %68 = vmatprep.subr.mxu0 0.0
    %69 = vmatpush1.msra.mxu0 0.0
    %70 = vmatprep.subr.mxu0 0.0
    %71 = vmatpush1.msra.mxu0 0.0
    %72 = vmatprep.subr.mxu0 0.0
    %73 = vmatpush1.msra.mxu0 0.0
    %74 = vmatprep.subr.mxu0 0.0
    %75 = vmatpush1.msra.mxu0 0.0
    %76 = vmatprep.subr.mxu0 0.0
    %77 = vmatpush1.msra.mxu0 0.0
    %78 = vmatprep.subr.mxu0 0.0
    %79 = vmatpush1.msra.mxu0 0.0
    %80 = vmatprep.subr.mxu0 0.0
    %81 = vmatpush1.msra.mxu0 0.0
    %82 = vmatprep.subr.mxu0 0.0
    %83 = vmatpush1.msra.mxu0 0.0
    %84 = vmatprep.subr.mxu0 0.0
    %85 = vmatpush1.msra.mxu0 0.0
    %86 = vmatprep.subr.mxu0 0.0
    %87 = vmatpush1.msra.mxu0 0.0
    %88 = vmatprep.subr.mxu0 0.0
    %89 = vmatpush1.msra.mxu0 0.0
    %90 = vmatprep.subr.mxu0 0.0
    %91 = vmatpush1.msra.mxu0 0.0
    %92 = vmatprep.subr.mxu0 0.0
    %93 = vmatpush1.msra.mxu0 0.0
    %94 = vmatprep.subr.mxu0 0.0
    %95 = vmatpush1.msra.mxu0 0.0
    %96 = vmatprep.subr.mxu0 0.0
    %97 = vmatpush1.msra.mxu0 0.0
    %98 = vmatprep.subr.mxu0 0.0
    %99 = vmatpush1.msra.mxu0 0.0
    %100 = vmatprep.subr.mxu0 0.0
    %101 = vmatpush1.msra.mxu0 0.0
    %102 = vmatprep.subr.mxu0 0.0
    %103 = vmatpush1.msra.mxu0 0.0
    %104 = vmatprep.subr.mxu0 0.0
    %105 = vmatpush1.msra.mxu0 0.0
    %106 = vmatprep.subr.mxu0 0.0
    %107 = vmatpush1.msra.mxu0 0.0
    %108 = vmatprep.subr.mxu0 0.0
    %109 = vmatpush1.msra.mxu0 0.0
    %110 = vmatprep.subr.mxu0 0.0
    %111 = vmatpush1.msra.mxu0 0.0
    %112 = vmatprep.mubr.f32.mxu0 0.0
    %113 = vmatmul.mubr.f32.gmra.mrb[0].mxu0 %v46
    %v114 = vpop.f32.mrb[0].mxu0
    %v115 = vadd.f32 %v43, %v114
    %v116 = vpop.f32.mrb[0].mxu0
    %117 = vdwg.mxu0
    %vm118 = vcmask 261120
    %v119 = vsel %vm118, %v115, 0.0
    %120 = vadd.xlane.f32.xlu0 %v119
    %v121 = vpop.xlane.xlu0 %120
    %v122 = vmul.f32 %v115, %v115
    %v123 = vsel %vm118, %v122, 0.0
    %124 = vadd.xlane.f32.xlu0 %v123
    %v125 = vpop.xlane.xlu0 %124
    %v126 = vmul.f32 %v121, 0.03125
    %v127 = vmul.f32 %v125, 0.03125
    %v128 = vmul.f32 %v126, %v126
    %v129 = vsub.f32 %v127, %v128
    %v130 = vmax.f32 %v129, 0.0
    %v131 = vadd.f32 %v130, 32.0
    %v132 = vrsqrt.pop %v131
    %v133 = vlaneseq
    %v134 = vshrl.u32 %v133, 7
    %v135 = vsub.s32 0, %v134
    %v136 = vrot.slane %v38, %v135
    %v137 = vmul.f32 %v132, %v136
    %v138 = vmul.f32 %v126, %v137
    %v139 = vlaneseq
    %v140 = vshrl.u32 %v139, 7
    %v141 = vsub.s32 0, %v140
    %v142 = vrot.slane %v39, %v141
    %v143 = vsub.f32 %v142, %v138
    %v144 = vmul.f32 %v115, %v137
    %v145 = vadd.f32 %v144, %v143
    %v146 = vmax.f32 %v145, 0.0
    %v147 = vld [vmem:[#allocation2] sm:$0xff]
    %v148 = vld [vmem:[#allocation2 + $0x8] sm:$0xff]
    %v149 = vld [vmem:[#allocation2 + $0x10] sm:$0xff]
    %v150 = vld [vmem:[#allocation2 + $0x18] sm:$0xff]
    %v151 = vld [vmem:[%s3 + $0x3] sm:$0x1]
    %v152 = vld [vmem:[%s3 + $0x4] sm:$0x1]
    %v153 = vld [vmem:[%s3 + $0x5] sm:$0x1]
    %v154 = vlaneseq
    %v155 = vshrl.u32 %v154, 7
    %v156 = vsub.s32 0, %v155
    %v157 = vrot.slane %v151, %v156
    %v159 = vsel %vm118, %v146, 0
    %161 = vmatprep.subr.mxu0 0.0
    %162 = vmatpush1.msra.mxu0 %v147
    %163 = vmatprep.subr.mxu0 0.0
    %164 = vmatpush1.msra.mxu0 %v148
    %165 = vmatprep.subr.mxu0 0.0
    %166 = vmatpush1.msra.mxu0 %v149
    %167 = vmatprep.subr.mxu0 0.0
    %168 = vmatpush1.msra.mxu0 %v150
    %169 = vmatprep.subr.mxu0 0.0
    %170 = vmatpush1.msra.mxu0 0.0
    %171 = vmatprep.subr.mxu0 0.0
    %172 = vmatpush1.msra.mxu0 0.0
    %173 = vmatprep.subr.mxu0 0.0
    %174 = vmatpush1.msra.mxu0 0.0
    %175 = vmatprep.subr.mxu0 0.0
    %176 = vmatpush1.msra.mxu0 0.0
    %177 = vmatprep.subr.mxu0 0.0
    %178 = vmatpush1.msra.mxu0 0.0
    %179 = vmatprep.subr.mxu0 0.0
    %180 = vmatpush1.msra.mxu0 0.0
    %181 = vmatprep.subr.mxu0 0.0
    %182 = vmatpush1.msra.mxu0 0.0
    %183 = vmatprep.subr.mxu0 0.0
    %184 = vmatpush1.msra.mxu0 0.0
    %185 = vmatprep.subr.mxu0 0.0
    %186 = vmatpush1.msra.mxu0 0.0
    %187 = vmatprep.subr.mxu0 0.0
    %188 = vmatpush1.msra.mxu0 0.0
    %189 = vmatprep.subr.mxu0 0.0
    %190 = vmatpush1.msra.mxu0 0.0
    %191 = vmatprep.subr.mxu0 0.0
    %192 = vmatpush1.msra.mxu0 0.0
    %193 = vmatprep.subr.mxu0 0.0
    %194 = vmatpush1.msra.mxu0 0.0
    %195 = vmatprep.subr.mxu0 0.0
    %196 = vmatpush1.msra.mxu0 0.0
    %197 = vmatprep.subr.mxu0 0.0
    %198 = vmatpush1.msra.mxu0 0.0
    %199 = vmatprep.subr.mxu0 0.0
    %200 = vmatpush1.msra.mxu0 0.0
    %201 = vmatprep.subr.mxu0 0.0
    %202 = vmatpush1.msra.mxu0 0.0
    %203 = vmatprep.subr.mxu0 0.0
    %204 = vmatpush1.msra.mxu0 0.0
    %205 = vmatprep.subr.mxu0 0.0
    %206 = vmatpush1.msra.mxu0 0.0
    %207 = vmatprep.subr.mxu0 0.0
    %208 = vmatpush1.msra.mxu0 0.0
    %209 = vmatprep.subr.mxu0 0.0
    %210 = vmatpush1.msra.mxu0 0.0
    %211 = vmatprep.subr.mxu0 0.0
    %212 = vmatpush1.msra.mxu0 0.0
    %213 = vmatprep.subr.mxu0 0.0
    %214 = vmatpush1.msra.mxu0 0.0
    %215 = vmatprep.subr.mxu0 0.0
    %216 = vmatpush1.msra.mxu0 0.0
    %217 = vmatprep.subr.mxu0 0.0
    %218 = vmatpush1.msra.mxu0 0.0
    %219 = vmatprep.subr.mxu0 0.0
    %220 = vmatpush1.msra.mxu0 0.0
    %221 = vmatprep.subr.mxu0 0.0
    %222 = vmatpush1.msra.mxu0 0.0
    %223 = vmatprep.subr.mxu0 0.0
    %224 = vmatpush1.msra.mxu0 0.0
    %225 = vmatprep.mubr.f32.mxu0 0.0
    %226 = vmatmul.mubr.f32.gmra.mrb[0].mxu0 %v159
    %v227 = vpop.f32.mrb[0].mxu0
    %v228 = vadd.f32 %v157, %v227
    %v229 = vpop.f32.mrb[0].mxu0
    %230 = vdwg.mxu0
    %v231 = vsel %vm118, %v228, 0.0
    %232 = vadd.xlane.f32.xlu0 %v231
    %v233 = vpop.xlane.xlu0 %232
    %v234 = vmul.f32 %v228, %v228
    %v235 = vsel %vm118, %v234, 0.0
    %236 = vadd.xlane.f32.xlu0 %v235
    %v237 = vpop.xlane.xlu0 %236
    %v238 = vmul.f32 %v233, 0.03125
    %v239 = vmul.f32 %v237, 0.03125
    %v240 = vmul.f32 %v238, %v238
    %v241 = vsub.f32 %v239, %v240
    %v242 = vmax.f32 %v241, 0.0
    %v243 = vadd.f32 %v242, 32.0
    %v244 = vrsqrt.pop %v243
    %v245 = vlaneseq
    %v246 = vshrl.u32 %v245, 7
    %v247 = vsub.s32 0, %v246
    %v248 = vrot.slane %v152, %v247
    %v249 = vmul.f32 %v244, %v248
    %v250 = vmul.f32 %v238, %v249
    %v251 = vlaneseq
    %v252 = vshrl.u32 %v251, 7
    %v253 = vsub.s32 0, %v252
    %v254 = vrot.slane %v153, %v253
    %v255 = vsub.f32 %v254, %v250
    %v256 = vmul.f32 %v228, %v249
    %v257 = vadd.f32 %v256, %v255
    %v258 = vmax.f32 %v257, 0.0
    %s259 = scalar_lea.vmem [#allocation2], 32
    %v260 = vld [vmem:[%s259] sm:$0xff]
    %v261 = vld [vmem:[%s259 + $0x8] sm:$0xff]
    %v262 = vld [vmem:[%s259 + $0x10] sm:$0xff]
    %v263 = vld [vmem:[%s259 + $0x18] sm:$0xff]
    %v264 = vld [vmem:[%s3 + $0x6] sm:$0x1]
    %v265 = vld [vmem:[%s3 + $0x7] sm:$0x1]
    %v266 = vld [vmem:[%s3 + $0x8] sm:$0x1]
    %v267 = vlaneseq
    %v268 = vshrl.u32 %v267, 7
    %v269 = vsub.s32 0, %v268
    %v270 = vrot.slane %v264, %v269
    %v272 = vsel %vm118, %v258, 0
    %274 = vmatprep.subr.mxu0 0.0
    %275 = vmatpush1.msra.mxu0 %v260
    %276 = vmatprep.subr.mxu0 0.0
    %277 = vmatpush1.msra.mxu0 %v261
    %278 = vmatprep.subr.mxu0 0.0
    %279 = vmatpush1.msra.mxu0 %v262
    %280 = vmatprep.subr.mxu0 0.0
    %281 = vmatpush1.msra.mxu0 %v263
    %282 = vmatprep.subr.mxu0 0.0
    %283 = vmatpush1.msra.mxu0 0.0
    %284 = vmatprep.subr.mxu0 0.0
    %285 = vmatpush1.msra.mxu0 0.0
    %286 = vmatprep.subr.mxu0 0.0
    %287 = vmatpush1.msra.mxu0 0.0
    %288 = vmatprep.subr.mxu0 0.0
    %289 = vmatpush1.msra.mxu0 0.0
    %290 = vmatprep.subr.mxu0 0.0
    %291 = vmatpush1.msra.mxu0 0.0
    %292 = vmatprep.subr.mxu0 0.0
    %293 = vmatpush1.msra.mxu0 0.0
    %294 = vmatprep.subr.mxu0 0.0
    %295 = vmatpush1.msra.mxu0 0.0
    %296 = vmatprep.subr.mxu0 0.0
    %297 = vmatpush1.msra.mxu0 0.0
    %298 = vmatprep.subr.mxu0 0.0
    %299 = vmatpush1.msra.mxu0 0.0
    %300 = vmatprep.subr.mxu0 0.0
    %301 = vmatpush1.msra.mxu0 0.0
    %302 = vmatprep.subr.mxu0 0.0
    %303 = vmatpush1.msra.mxu0 0.0
    %304 = vmatprep.subr.mxu0 0.0
    %305 = vmatpush1.msra.mxu0 0.0
    %306 = vmatprep.subr.mxu0 0.0
    %307 = vmatpush1.msra.mxu0 0.0
    %308 = vmatprep.subr.mxu0 0.0
    %309 = vmatpush1.msra.mxu0 0.0
    %310 = vmatprep.subr.mxu0 0.0
    %311 = vmatpush1.msra.mxu0 0.0
    %312 = vmatprep.subr.mxu0 0.0
    %313 = vmatpush1.msra.mxu0 0.0
    %314 = vmatprep.subr.mxu0 0.0
    %315 = vmatpush1.msra.mxu0 0.0
    %316 = vmatprep.subr.mxu0 0.0
    %317 = vmatpush1.msra.mxu0 0.0
    %318 = vmatprep.subr.mxu0 0.0
    %319 = vmatpush1.msra.mxu0 0.0
    %320 = vmatprep.subr.mxu0 0.0
    %321 = vmatpush1.msra.mxu0 0.0
    %322 = vmatprep.subr.mxu0 0.0
    %323 = vmatpush1.msra.mxu0 0.0
    %324 = vmatprep.subr.mxu0 0.0
    %325 = vmatpush1.msra.mxu0 0.0
    %326 = vmatprep.subr.mxu0 0.0
    %327 = vmatpush1.msra.mxu0 0.0
    %328 = vmatprep.subr.mxu0 0.0
    %329 = vmatpush1.msra.mxu0 0.0
    %330 = vmatprep.subr.mxu0 0.0
    %331 = vmatpush1.msra.mxu0 0.0
    %332 = vmatprep.subr.mxu0 0.0
    %333 = vmatpush1.msra.mxu0 0.0
    %334 = vmatprep.subr.mxu0 0.0
    %335 = vmatpush1.msra.mxu0 0.0
    %336 = vmatprep.subr.mxu0 0.0
    %337 = vmatpush1.msra.mxu0 0.0
    %338 = vmatprep.mubr.f32.mxu0 0.0
    %339 = vmatmul.mubr.f32.gmra.mrb[0].mxu0 %v272
    %v340 = vpop.f32.mrb[0].mxu0
    %v341 = vadd.f32 %v270, %v340
    %v342 = vpop.f32.mrb[0].mxu0
    %343 = vdwg.mxu0
    %v344 = vmax.f32 %v341, 0.0
    %v345 = vsel %vm118, %v344, 0.0
    %346 = vadd.xlane.f32.xlu0 %v345
    %v347 = vpop.xlane.xlu0 %346
    %v348 = vmul.f32 %v344, %v344
    %v349 = vsel %vm118, %v348, 0.0
    %350 = vadd.xlane.f32.xlu0 %v349
    %v351 = vpop.xlane.xlu0 %350
    %v352 = vmul.f32 %v347, 0.03125
    %v353 = vmul.f32 %v351, 0.03125
    %v354 = vmul.f32 %v352, %v352
    %v355 = vsub.f32 %v353, %v354
    %v356 = vmax.f32 %v355, 0.0
    %v357 = vadd.f32 %v356, 32.0
    %v358 = vrsqrt.pop %v357
    %v359 = vlaneseq
    %v360 = vshrl.u32 %v359, 7
    %v361 = vsub.s32 0, %v360
    %v362 = vrot.slane %v265, %v361
    %v363 = vmul.f32 %v358, %v362
    %v364 = vmul.f32 %v352, %v363
    %v365 = vlaneseq
    %v366 = vshrl.u32 %v365, 7
    %v367 = vsub.s32 0, %v366
    %v368 = vrot.slane %v266, %v367
    %v369 = vsub.f32 %v368, %v364
    %v370 = vmul.f32 %v344, %v363
    %v371 = vadd.f32 %v370, %v369
    %v372 = vmax.f32 %v371, 0.0
    %s373 = scalar_lea.vmem [#allocation2], 64
    %v374 = vld [vmem:[%s373] sm:$0xff]
    %v375 = vld [vmem:[%s373 + $0x8] sm:$0xff]
    %v376 = vld [vmem:[%s373 + $0x10] sm:$0xff]
    %v377 = vld [vmem:[%s373 + $0x18] sm:$0xff]
    %v378 = vld [vmem:[%s3 + $0x9] sm:$0x1]
    %v379 = vld [vmem:[%s3 + $0xa] sm:$0x1]
    %v380 = vld [vmem:[%s3 + $0xb] sm:$0x1]
    %v381 = vlaneseq
    %v382 = vshrl.u32 %v381, 7
    %v383 = vsub.s32 0, %v382
    %v384 = vrot.slane %v378, %v383
    %v386 = vsel %vm118, %v372, 0
    %388 = vmatprep.subr.mxu0 0.0
    %389 = vmatpush1.msra.mxu0 %v374
    %390 = vmatprep.subr.mxu0 0.0
    %391 = vmatpush1.msra.mxu0 %v375
    %392 = vmatprep.subr.mxu0 0.0
    %393 = vmatpush1.msra.mxu0 %v376
    %394 = vmatprep.subr.mxu0 0.0
    %395 = vmatpush1.msra.mxu0 %v377
    %396 = vmatprep.subr.mxu0 0.0
    %397 = vmatpush1.msra.mxu0 0.0
    %398 = vmatprep.subr.mxu0 0.0
    %399 = vmatpush1.msra.mxu0 0.0
    %400 = vmatprep.subr.mxu0 0.0
    %401 = vmatpush1.msra.mxu0 0.0
    %402 = vmatprep.subr.mxu0 0.0
    %403 = vmatpush1.msra.mxu0 0.0
    %404 = vmatprep.subr.mxu0 0.0
    %405 = vmatpush1.msra.mxu0 0.0
    %406 = vmatprep.subr.mxu0 0.0
    %407 = vmatpush1.msra.mxu0 0.0
    %408 = vmatprep.subr.mxu0 0.0
    %409 = vmatpush1.msra.mxu0 0.0
    %410 = vmatprep.subr.mxu0 0.0
    %411 = vmatpush1.msra.mxu0 0.0
    %412 = vmatprep.subr.mxu0 0.0
    %413 = vmatpush1.msra.mxu0 0.0
    %414 = vmatprep.subr.mxu0 0.0
    %415 = vmatpush1.msra.mxu0 0.0
    %416 = vmatprep.subr.mxu0 0.0
    %417 = vmatpush1.msra.mxu0 0.0
    %418 = vmatprep.subr.mxu0 0.0
    %419 = vmatpush1.msra.mxu0 0.0
    %420 = vmatprep.subr.mxu0 0.0
    %421 = vmatpush1.msra.mxu0 0.0
    %422 = vmatprep.subr.mxu0 0.0
    %423 = vmatpush1.msra.mxu0 0.0
    %424 = vmatprep.subr.mxu0 0.0
    %425 = vmatpush1.msra.mxu0 0.0
    %426 = vmatprep.subr.mxu0 0.0
    %427 = vmatpush1.msra.mxu0 0.0
    %428 = vmatprep.subr.mxu0 0.0
    %429 = vmatpush1.msra.mxu0 0.0
    %430 = vmatprep.subr.mxu0 0.0
    %431 = vmatpush1.msra.mxu0 0.0
    %432 = vmatprep.subr.mxu0 0.0
    %433 = vmatpush1.msra.mxu0 0.0
    %434 = vmatprep.subr.mxu0 0.0
    %435 = vmatpush1.msra.mxu0 0.0
    %436 = vmatprep.subr.mxu0 0.0
    %437 = vmatpush1.msra.mxu0 0.0
    %438 = vmatprep.subr.mxu0 0.0
    %439 = vmatpush1.msra.mxu0 0.0
    %440 = vmatprep.subr.mxu0 0.0
    %441 = vmatpush1.msra.mxu0 0.0
    %442 = vmatprep.subr.mxu0 0.0
    %443 = vmatpush1.msra.mxu0 0.0
    %444 = vmatprep.subr.mxu0 0.0
    %445 = vmatpush1.msra.mxu0 0.0
    %446 = vmatprep.subr.mxu0 0.0
    %447 = vmatpush1.msra.mxu0 0.0
    %448 = vmatprep.subr.mxu0 0.0
    %449 = vmatpush1.msra.mxu0 0.0
    %450 = vmatprep.subr.mxu0 0.0
    %451 = vmatpush1.msra.mxu0 0.0
    %452 = vmatprep.mubr.f32.mxu0 0.0
    %453 = vmatmul.mubr.f32.gmra.mrb[0].mxu0 %v386
    %v454 = vpop.f32.mrb[0].mxu0
    %v455 = vadd.f32 %v384, %v454
    %v456 = vpop.f32.mrb[0].mxu0
    %457 = vdwg.mxu0
    %v458 = vmax.f32 %v455, 0.0
    %v459 = vsel %vm118, %v458, 0.0
    %460 = vadd.xlane.f32.xlu0 %v459
    %v461 = vpop.xlane.xlu0 %460
    %v462 = vmul.f32 %v458, %v458
    %v463 = vsel %vm118, %v462, 0.0
    %464 = vadd.xlane.f32.xlu0 %v463
    %v465 = vpop.xlane.xlu0 %464
    %v466 = vmul.f32 %v461, 0.03125
    %v467 = vmul.f32 %v465, 0.03125
    %v468 = vmul.f32 %v466, %v466
    %v469 = vsub.f32 %v467, %v468
    %v470 = vmax.f32 %v469, 0.0
    %v471 = vadd.f32 %v470, 32.0
    %v472 = vrsqrt.pop %v471
    %v473 = vlaneseq
    %v474 = vshrl.u32 %v473, 7
    %v475 = vsub.s32 0, %v474
    %v476 = vrot.slane %v379, %v475
    %v477 = vmul.f32 %v472, %v476
    %v478 = vmul.f32 %v466, %v477
    %v479 = vlaneseq
    %v480 = vshrl.u32 %v479, 7
    %v481 = vsub.s32 0, %v480
    %v482 = vrot.slane %v380, %v481
    %v483 = vsub.f32 %v482, %v478
    %v484 = vmul.f32 %v458, %v477
    %v485 = vadd.f32 %v484, %v483
    %v486 = vmax.f32 %v485, 0.0
    %v487 = vld [vmem:[%s4] sm:$0xff]
    %v488 = vld [vmem:[%s4 + $0x8] sm:$0xff]
    %v489 = vld [vmem:[%s4 + $0x10] sm:$0xff]
    %v490 = vld [vmem:[%s4 + $0x18] sm:$0xff]
    %v491 = vld [vmem:[%s4 + $0x20] sm:$0x1]
    %v492 = vlaneseq
    %v493 = vshrl.u32 %v492, 7
    %v494 = vsub.s32 0, %v493
    %v495 = vrot.slane %v491, %v494
    %v497 = vsel %vm118, %v486, 0
    %499 = vmatprep.subr.mxu0 0.0
    %500 = vmatpush1.msra.mxu0 %v487
    %501 = vmatprep.subr.mxu0 0.0
    %502 = vmatpush1.msra.mxu0 %v488
    %503 = vmatprep.subr.mxu0 0.0
    %504 = vmatpush1.msra.mxu0 %v489
    %505 = vmatprep.subr.mxu0 0.0
    %506 = vmatpush1.msra.mxu0 %v490
    %507 = vmatprep.subr.mxu0 0.0
    %508 = vmatpush1.msra.mxu0 0.0
    %509 = vmatprep.subr.mxu0 0.0
    %510 = vmatpush1.msra.mxu0 0.0
    %511 = vmatprep.subr.mxu0 0.0
    %512 = vmatpush1.msra.mxu0 0.0
    %513 = vmatprep.subr.mxu0 0.0
    %514 = vmatpush1.msra.mxu0 0.0
    %515 = vmatprep.subr.mxu0 0.0
    %516 = vmatpush1.msra.mxu0 0.0
    %517 = vmatprep.subr.mxu0 0.0
    %518 = vmatpush1.msra.mxu0 0.0
    %519 = vmatprep.subr.mxu0 0.0
    %520 = vmatpush1.msra.mxu0 0.0
    %521 = vmatprep.subr.mxu0 0.0
    %522 = vmatpush1.msra.mxu0 0.0
    %523 = vmatprep.subr.mxu0 0.0
    %524 = vmatpush1.msra.mxu0 0.0
    %525 = vmatprep.subr.mxu0 0.0
    %526 = vmatpush1.msra.mxu0 0.0
    %527 = vmatprep.subr.mxu0 0.0
    %528 = vmatpush1.msra.mxu0 0.0
    %529 = vmatprep.subr.mxu0 0.0
    %530 = vmatpush1.msra.mxu0 0.0
    %531 = vmatprep.subr.mxu0 0.0
    %532 = vmatpush1.msra.mxu0 0.0
    %533 = vmatprep.subr.mxu0 0.0
    %534 = vmatpush1.msra.mxu0 0.0
    %535 = vmatprep.subr.mxu0 0.0
    %536 = vmatpush1.msra.mxu0 0.0
    %537 = vmatprep.subr.mxu0 0.0
    %538 = vmatpush1.msra.mxu0 0.0
    %539 = vmatprep.subr.mxu0 0.0
    %540 = vmatpush1.msra.mxu0 0.0
    %541 = vmatprep.subr.mxu0 0.0
    %542 = vmatpush1.msra.mxu0 0.0
    %543 = vmatprep.subr.mxu0 0.0
    %544 = vmatpush1.msra.mxu0 0.0
    %545 = vmatprep.subr.mxu0 0.0
    %546 = vmatpush1.msra.mxu0 0.0
    %547 = vmatprep.subr.mxu0 0.0
    %548 = vmatpush1.msra.mxu0 0.0
    %549 = vmatprep.subr.mxu0 0.0
    %550 = vmatpush1.msra.mxu0 0.0
    %551 = vmatprep.subr.mxu0 0.0
    %552 = vmatpush1.msra.mxu0 0.0
    %553 = vmatprep.subr.mxu0 0.0
    %554 = vmatpush1.msra.mxu0 0.0
    %555 = vmatprep.subr.mxu0 0.0
    %556 = vmatpush1.msra.mxu0 0.0
    %557 = vmatprep.subr.mxu0 0.0
    %558 = vmatpush1.msra.mxu0 0.0
    %559 = vmatprep.subr.mxu0 0.0
    %560 = vmatpush1.msra.mxu0 0.0
    %561 = vmatprep.subr.mxu0 0.0
    %562 = vmatpush1.msra.mxu0 0.0
    %563 = vmatprep.mubr.f32.mxu0 0.0
    %564 = vmatmul.mubr.f32.gmra.mrb[0].mxu0 %v497
    %v565 = vpop.f32.mrb[0].mxu0
    %v566 = vadd.f32 %v495, %v565
    %v567 = vpop.f32.mrb[0].mxu0
    %568 = vdwg.mxu0
    %vm569 = vcmask 31744
    %570 = vst.msk [vmem:[%s5] sm:$0xff] %vm569, %v566
    // Predicated region
    $region26: #{tpu_custom_call.1} parent=1 // pred_check
      _
    $region27: #{tpu_custom_call.1} parent=1 // pred_check_branch
      %572 = sbr.rel (0) target = $region29
    $region28: #{tpu_custom_call.1} parent=1 // pred_region
      _
    $region29: #{tpu_custom_call.1} parent=1 // pred_fallthru
      _
    // Predicated region
    $region30: #{tpu_custom_call.1} parent=1 // pred_check
      _
    $region31: #{tpu_custom_call.1} parent=1 // pred_check_branch
      %574 = sbr.rel (0) target = $region33
    $region32: #{tpu_custom_call.1} parent=1 // pred_region
      _
    $region33: #{tpu_custom_call.1} parent=1 // pred_fallthru
      _
    %575 = vsyncpa [#allocation3], 1

</llo_original>
